<compile_context>
chip_gen: v7x
topology: tpu7x:2x2x1
jax: 0.10.0
libtpu: 0.0.40
codegen_flags: <defaults>
</compile_context>

<pallas_src>
import math
import functools

import jax
import jax.numpy as jnp
from jax.experimental import pallas as pl
from jax.experimental.pallas import tpu as pltpu


def make_pe(d_model: int, max_len: int = 5000, dtype=jnp.float32):
    """Deterministic buffer init, matching the torch __init__ exactly."""
    position = jnp.arange(max_len, dtype=jnp.float32)[:, None]            # [max_len, 1]
    div_term = jnp.exp(jnp.arange(0, d_model, 2, dtype=jnp.float32)
                       * (-math.log(10000.0) / d_model))                  # [d_model//2]
    pe = jnp.zeros((max_len, d_model), dtype=jnp.float32)
    pe = pe.at[:, 0::2].set(jnp.sin(position * div_term))
    pe = pe.at[:, 1::2].set(jnp.cos(position * div_term))
    return pe[None, :, :].astype(dtype)                                   # [1, max_len, d_model]


# ----------------------------------------------------------------------------
# Kernels (operate on the flattened [S, B*D] view)
# ----------------------------------------------------------------------------

def _pe_add_kernel(x_ref, pe_ref, o_ref):
    # eval-mode dropout is identity -> hot path is the broadcasted add.
    # x_ref: (tile_s, BD), pe_ref: (1, BD) resident block, broadcast over rows.
    o_ref[...] = x_ref[...] + pe_ref[...]


def _pe_add_dropout_kernel(seed_ref, x_ref, pe_ref, o_ref, *, p, tile_s):
    # Training-mode inverted dropout with a portable counter-based hash PRNG
    # (pure 32-bit integer VPU ops; no pltpu.prng_* so it also interprets).
    y = x_ref[...] + pe_ref[...]
    shape = y.shape

    rows = jax.lax.broadcasted_iota(jnp.int32, shape, 0).astype(jnp.uint32)
    cols = jax.lax.broadcasted_iota(jnp.int32, shape, 1).astype(jnp.uint32)
    block_off = (pl.program_id(0) * tile_s).astype(jnp.uint32)
    seed = seed_ref[0].astype(jnp.uint32)

    # mix (global_row, col, seed) then murmur3-style finalize
    h = (rows + block_off) * jnp.uint32(0x9E3779B1)
    h = h ^ (cols * jnp.uint32(0x85EBCA77))
    h = h + seed * jnp.uint32(0xC2B2AE3D)
    h = h ^ (h >> 16)
    h = h * jnp.uint32(0x7FEB352D)
    h = h ^ (h >> 15)
    h = h * jnp.uint32(0x846CA68B)
    h = h ^ (h >> 16)

    # integer-threshold compare (no float convert) + precomputed reciprocal scale
    thresh = jnp.uint32(min(int(round(p * 4294967296.0)), 4294967295))
    keep = h >= thresh                                   # P(keep) = 1 - p
    scale = jnp.float32(1.0 / (1.0 - p))
    o_ref[...] = jnp.where(keep, y * scale, 0.0).astype(o_ref.dtype)


# ----------------------------------------------------------------------------
# Wrapper
# ----------------------------------------------------------------------------

def _choose_tile_s(S: int, row_bytes: int, target_bytes: int) -> int:
    """Largest multiple-of-8 row count whose block is ~target_bytes (or full S)."""
    rows = (target_bytes // max(row_bytes, 1)) // 8 * 8
    rows = max(rows, 8)
    if rows >= S:
        return S                      # single full-extent block (no 8-multiple needed)
    return rows                       # grid = cdiv(S, rows); edge block auto-masked


def positional_encoding(x, pe, *, p: float = 0.1, training: bool = False,
                        seed: int = 0, target_block_bytes: int = 2 << 20,
                        min_kernel_bytes: int = 1 << 20, force_kernel: bool = False):
    """x: [S, B, D]; pe: [1, max_len, D]. Returns dropout(x + pe[:, :B])."""
    S, B, D = x.shape
    assert 0.0 <= p < 1.0
    pe_slice = pe[0, :B, :]                     # [B, D] == pe[:, :x.size(1)] squeezed

    # Tiny problems: pallas_call launch overhead dwarfs the work -> pure JAX.
    nbytes = x.size * x.dtype.itemsize
    if nbytes < min_kernel_bytes and not force_kernel:
        y = x + pe_slice[None]
        if training and p > 0.0:
            keep = jax.random.bernoulli(jax.random.PRNGKey(seed), 1.0 - p, x.shape)
            y = jnp.where(keep, y / (1.0 - p), 0.0)
        return y.astype(x.dtype)

    # Lane-dense / sublane-full layout: flatten the last two dims.
    BD = B * D
    x2 = x.reshape(S, BD)
    pe2 = pe_slice.reshape(1, BD)

    row_bytes = BD * x.dtype.itemsize
    tile_s = _choose_tile_s(S, row_bytes, target_block_bytes)
    grid = (pl.cdiv(S, tile_s),)

    # index_maps accept *_ so they work with and without scalar-prefetch args
    x_spec = pl.BlockSpec((tile_s, BD), lambda i, *_: (i, 0))
    pe_spec = pl.BlockSpec((1, BD), lambda i, *_: (0, 0))     # constant -> resident, no re-DMA
    out_spec = pl.BlockSpec((tile_s, BD), lambda i, *_: (i, 0))
    out_shape = jax.ShapeDtypeStruct((S, BD), x.dtype)

    # ~2 MiB tiles => ~(2*in + 2*out) ≈ 8-9 MiB double-buffered footprint:
    # fits v5e/v6e (128 MiB) and v7x (64 MiB) comfortably; raise scoped limit.
    cparams = pltpu.CompilerParams(
        dimension_semantics=("parallel",),       # independent steps -> both v7x TCs
        vmem_limit_bytes=32 * 1024 * 1024)

    if (not training) or p == 0.0:
        out2 = pl.pallas_call(
            _pe_add_kernel,
            out_shape=out_shape,
            grid_spec=pltpu.PrefetchScalarGridSpec(
                num_scalar_prefetch=0, grid=grid,
                in_specs=[x_spec, pe_spec], out_specs=out_spec),
            compiler_params=cparams,
        )(x2, pe2)
    else:
        seed_arr = jnp.array([seed], dtype=jnp.int32)
        kernel = functools.partial(_pe_add_dropout_kernel, p=float(p), tile_s=tile_s)
        out2 = pl.pallas_call(
            kernel,
            out_shape=out_shape,
            grid_spec=pltpu.PrefetchScalarGridSpec(
                num_scalar_prefetch=1, grid=grid,
                in_specs=[x_spec, pe_spec], out_specs=out_spec),
            compiler_params=cparams,
        )(seed_arr, x2, pe2)

    return out2.reshape(S, B, D)


if __name__ == "__main__":
    seq_len, batch, d_model, max_len = 8, 2, 32, 64

    key = jax.random.PRNGKey(0)
    x = jax.random.normal(key, (seq_len, batch, d_model), dtype=jnp.float32)
    pe = make_pe(d_model, max_len)

    # eval-mode forward (dropout == identity), matches torch module in .eval()
    out = jax.block_until_ready(
        positional_encoding(x, pe, p=0.1, training=False, force_kernel=True))

    # pure-JAX reference of the torch forward: x + pe[:, :x.size(1)]
    ref = x + pe[:, :batch]                    # [1, B, D] broadcasts over seq
    assert out.shape == x.shape and out.dtype == x.dtype
    assert jnp.allclose(out, ref, atol=1e-6, rtol=1e-6)

    # training-mode dropout kernel: every output is 0 or (x+pe)/(1-p)
    p_drop = 0.1
    out_tr = jax.block_until_ready(
        positional_encoding(x, pe, p=p_drop, training=True, seed=123,
                            force_kernel=True))
    assert out_tr.shape == x.shape and out_tr.dtype == x.dtype
    scaled = ref / (1.0 - p_drop)
    ok = jnp.all((out_tr == 0.0) | jnp.isclose(out_tr, scaled, atol=1e-5, rtol=1e-5))
    assert bool(ok)

    print("KERNEL_OK")
</pallas_src>

<mosaic_0001>
module attributes {stable_mosaic.version = 11 : i64} {
  func.func @_pe_add_kernel(%arg0: i32, %arg1: memref<8x64xf32, #tpu.memory_space<vmem>>, %arg2: memref<1x64xf32, #tpu.memory_space<vmem>>, %arg3: memref<8x64xf32, #tpu.memory_space<vmem>>) attributes {dimension_semantics = [#tpu.dimension_semantics<parallel>], iteration_bounds = array<i64: 1>, scalar_prefetch = 0 : i64, scratch_operands = 0 : i64, tpu.core_type = #tpu.core_type<tc>, window_params = [{transform_indices = @transform_0, window_bounds = array<i64: 8, 64>}, {pipeline_mode = #tpu.pipeline_mode<synchronous>, transform_indices = @transform_1, window_bounds = array<i64: 1, 64>}, {transform_indices = @transform_2, window_bounds = array<i64: 8, 64>}]} {
    %c0 = arith.constant 0 : index
    %c0_0 = arith.constant 0 : index
    %0 = vector.load %arg1[%c0, %c0_0] : memref<8x64xf32, #tpu.memory_space<vmem>>, vector<8x64xf32>
    %c0_1 = arith.constant 0 : index
    %c0_2 = arith.constant 0 : index
    %1 = vector.load %arg2[%c0_1, %c0_2] : memref<1x64xf32, #tpu.memory_space<vmem>>, vector<1x64xf32>
    %2 = vector.broadcast %1 : vector<1x64xf32> to vector<8x64xf32>
    %3 = arith.addf %0, %2 : vector<8x64xf32>
    %c0_3 = arith.constant 0 : index
    %c0_4 = arith.constant 0 : index
    %4 = vector.load %arg3[%c0_3, %c0_4] : memref<8x64xf32, #tpu.memory_space<vmem>>, vector<8x64xf32>
    tpu.vector_store %arg3[%c0_3, %c0_4], %3 {strides = array<i32>} : memref<8x64xf32, #tpu.memory_space<vmem>>, vector<8x64xf32>,
    return
  }
  func.func @transform_0(%arg0: i32) -> (i32, i32) {
    %c0_i32 = arith.constant 0 : i32
    %c0_i32_0 = arith.constant 0 : i32
    return %arg0, %c0_i32 : i32, i32
  }
  func.func @transform_1(%arg0: i32) -> (i32, i32) {
    %c0_i32 = arith.constant 0 : i32
    %c0_i32_0 = arith.constant 0 : i32
    %c0_i32_1 = arith.constant 0 : i32
    return %c0_i32, %c0_i32_0 : i32, i32
  }
  func.func @transform_2(%arg0: i32) -> (i32, i32) {
    %c0_i32 = arith.constant 0 : i32
    %c0_i32_0 = arith.constant 0 : i32
    return %arg0, %c0_i32 : i32, i32
  }
}

</mosaic_0001>

<llo_original>
// kernel: tpu_custom_call.1
$region0: #{tpu_custom_call.1}
  #allocation0 [shape = 'u32[]', space=smem, size = 0x4, offset = 0x4, fixed_abs, tag = 'smem constant byte address 0x4 - core index']
  #allocation1 [shape = 'u32[144,128]{1,0:T(1,128)}', space=vmem, size = 0x12000, scoped, tag = 'internal scratch']
  %s0 = inlined_call_operand.hbm [shape: f32[8,64], index: 0, kind: input, shape index: {}]
  %s1 = inlined_call_operand.vmem [shape: f32[1,64], index: 1, kind: input, shape index: {}]
  %s2 = inlined_call_operand.hbm [shape: f32[8,64], index: 2, kind: output, shape index: {}]
  %s3 = sld [smem:[#allocation0]]
  $region22: #{tpu_custom_call.1} parent=0
    _
  %s5 = ssub.s32 1, %s3
  %s6 = scalar_select 0, %s5, %s3
  $region1: #{tpu_custom_call.1} parent=0
    #allocation2 [shape = 'u8[4096]{0}', space=vmem, size = 0x1000, scoped, tag = 'input window, operand 0, single buffered']
    #allocation3 [shape = 's32[1]{0}', space=sflag, size = 0x4, scoped, tag = 'scoped memory for tpu_custom_call.1']
    #allocation4 [shape = 's32[1]{0}', space=sflag, size = 0x4, scoped, tag = 'scoped memory for tpu_custom_call.1']
    #allocation5 [shape = 'u8[4096]{0}', space=vmem, size = 0x1000, scoped, tag = 'output window, operand 0, single buffered']
    %7 = vsyncpa [#allocation3], 0
    %8 = vsyncpa [#allocation4], 0
    // Predicated region
    $region2: #{tpu_custom_call.1} parent=1 // pred_check
      _
    $region3: #{tpu_custom_call.1} parent=1 // pred_check_branch
      %10 = sbr.rel (0) target = $region5
    $region4: #{tpu_custom_call.1} parent=1 // pred_region
      %s12 = ssub.s32 128, 128
      %13 = vsyncadd [#allocation3], %s12
      %s15 = sshll.u32 [#allocation2], 4
      %s16 = int_to_ptr.vmem [resolvable:$true] %s15
      %18 = dma.hbm_to_vmem [thread:$0]  %s0, 128, %s16, [#allocation3]
    $region5: #{tpu_custom_call.1} parent=1 // pred_fallthru
      _
    // Predicated region
    $region6: #{tpu_custom_call.1} parent=1 // pred_check
      _
    $region7: #{tpu_custom_call.1} parent=1 // pred_check_branch
      %20 = sbr.rel (0) target = $region9
    $region8: #{tpu_custom_call.1} parent=1 // pred_region
      _
    $region9: #{tpu_custom_call.1} parent=1 // pred_fallthru
      _
    // Predicated region
    $region10: #{tpu_custom_call.1} parent=1 // pred_check
      _
    $region11: #{tpu_custom_call.1} parent=1 // pred_check_branch
      %22 = sbr.rel (0) target = $region13
    $region12: #{tpu_custom_call.1} parent=1 // pred_region
      %23 = dma.done [#allocation3], 128
    $region13: #{tpu_custom_call.1} parent=1 // pred_fallthru
      _
    %v24 = vld [vmem:[#allocation2] sm:$0xff]
    %v25 = vld [vmem:[%s1] sm:$0x1]
    %v27 = vlaneseq
    %v28 = vshrl.u32 %v27, 7
    %v29 = vsub.s32 0, %v28
    %v30 = vrot.slane %v25, %v29
    %v32 = vadd.f32 %v24, %v30
    %vm33 = vcmask 523264
    %34 = vst.msk [vmem:[#allocation5] sm:$0xff] %vm33, %v32
    // Predicated region
    $region14: #{tpu_custom_call.1} parent=1 // pred_check
      _
    $region15: #{tpu_custom_call.1} parent=1 // pred_check_branch
      %36 = sbr.rel (0) target = $region17
    $region16: #{tpu_custom_call.1} parent=1 // pred_region
      %s38 = ssub.s32 128, 128
      %39 = vsyncadd [#allocation4], %s38
      %s41 = sshll.u32 [#allocation5], 4
      %s42 = int_to_ptr.vmem [resolvable:$true] %s41
      %44 = dma.vmem_to_hbm [thread:$0]  %s42, 128, %s2, [#allocation4]
    $region17: #{tpu_custom_call.1} parent=1 // pred_fallthru
      _
    // Predicated region
    $region18: #{tpu_custom_call.1} parent=1 // pred_check
      _
    $region19: #{tpu_custom_call.1} parent=1 // pred_check_branch
      %46 = sbr.rel (0) target = $region21
    $region20: #{tpu_custom_call.1} parent=1 // pred_region
      %47 = dma.done [#allocation4], 128
    $region21: #{tpu_custom_call.1} parent=1 // pred_fallthru
      _
    %48 = vsyncpa [#allocation3], 1
    %49 = vsyncpa [#allocation4], 1

</llo_original>
